<compile_context>
chip_gen: v5e
topology: v5e:2x2
jax: 0.10.0
libtpu: 0.0.40
codegen_flags: <defaults>
</compile_context>

<pallas_src>
import jax
import jax.numpy as jnp
from jax.experimental import pallas as pl
from jax.experimental.pallas import tpu as pltpu


def _round_up(v, m):
    return ((v + m - 1) // m) * m


def rmm_policy_kernel(xt_ref, w12_ref, b1a_ref, b2a_ref,
                      w1b_ref, b1b_ref, w2a1_ref, w2b_ref, b2b_ref,
                      out_ref):
    xt = xt_ref[...]                                   # (S, bm), batch on lanes
    H = b1a_ref.shape[0]

    # Fused x-contraction for both branches: (2H, S) @ (S, bm) -> (2H, bm)
    hx = jnp.dot(w12_ref[...], xt, preferred_element_type=jnp.float32)

    # fc1: Linear -> ReLU -> Linear -> sigmoid
    h1 = jnp.maximum(hx[:H, :] + b1a_ref[...], 0.0)            # (H, bm)
    z1 = jnp.dot(w1b_ref[...], h1,
                 preferred_element_type=jnp.float32) + b1b_ref[...]
    a1 = pl.reciprocal(1.0 + jnp.exp(-z1), approx=True)        # sigmoid, (A, bm)

    # fc2 on cat([x, a1]) without materializing the concat:
    #   W2a @ cat([x, a1]) == W2a[:, :S] @ x  +  W2a[:, S:] @ a1
    pre2 = hx[H:, :] + jnp.dot(w2a1_ref[...], a1,
                               preferred_element_type=jnp.float32) + b2a_ref[...]
    h2 = jnp.maximum(pre2, 0.0)                                 # (H, bm)
    z2 = jnp.dot(w2b_ref[...], h2,
                 preferred_element_type=jnp.float32) + b2b_ref[...]
    a2 = jnp.tanh(z2)                                           # (A, bm)

    # out = cat([a1, a2]) built in-register (sublane concat) -> single store.
    out_ref[...] = jnp.concatenate([a1, a2], axis=0).astype(out_ref.dtype)


def rmm_policy_forward(x, params, *, block_cols=4096):
    """x: (B, state_dim) f32.  params holds PyTorch-layout (out, in) weights.

    Returns (B, 2 * action_dim) f32, matching RMMPolicyNet.forward.
    """
    B, S = x.shape
    Hd = params["w1a"].shape[0]
    A = params["w1b"].shape[0]

    # One-time weight/bias folding outside the hot path (native (out, in) layout).
    w1a = jnp.asarray(params["w1a"])                       # (H, S)
    w2x = jnp.asarray(params["w2a"][:, :S])                # (H, S)
    w12 = jnp.concatenate([w1a, w2x], axis=0)              # (2H, S) fused x-contraction
    w2a1 = jnp.asarray(params["w2a"][:, S:])               # (H, A)
    w1b = jnp.asarray(params["w1b"])                       # (A, H)
    w2b = jnp.asarray(params["w2b"])                       # (A, H)
    b1a = jnp.asarray(params["b1a"]).reshape(Hd, 1)
    b2a = jnp.asarray(params["b2a"]).reshape(Hd, 1)
    b1b = jnp.asarray(params["b1b"]).reshape(A, 1)
    b2b = jnp.asarray(params["b2b"]).reshape(A, 1)

    # Lane-dense layout: batch on the lane axis.  (Callers can supply/consume
    # this layout directly to drop these two small XLA transposes.)
    xt = x.T                                               # (S, B)

    # Lane-tile selection: big tiles to amortize per-step overhead, 128-lane
    # aligned, ragged last block handled by Pallas masking, and >= 2 grid
    # steps for large B so both v7x TensorCores get work.
    if B <= 256:
        bm = B                                             # full lane dim, 1 step
    else:
        bm = min(block_cols, _round_up(pl.cdiv(B, 2), 128))
        bm = max(128, (bm // 128) * 128)
    grid = (pl.cdiv(B, bm),)

    resident = lambda i: (0, 0)   # weights/biases: same block every grid step

    flops = 2 * B * (2 * Hd * S + A * Hd + Hd * A + A * Hd)
    transcendentals = 2 * B * A                            # exp (sigmoid) + tanh
    bytes_accessed = 4 * (B * S + B * 2 * A + w12.size + w1b.size
                          + w2a1.size + w2b.size + 2 * Hd + 2 * A)

    out_t = pl.pallas_call(
        rmm_policy_kernel,
        out_shape=jax.ShapeDtypeStruct((2 * A, B), jnp.float32),
        grid_spec=pltpu.PrefetchScalarGridSpec(
            num_scalar_prefetch=0,
            grid=grid,
            in_specs=[
                pl.BlockSpec((S, bm), lambda i: (0, i)),   # x^T lane block
                pl.BlockSpec((2 * Hd, S), resident),       # w12  (fused fc1a + fc2x)
                pl.BlockSpec((Hd, 1), resident),           # b1a
                pl.BlockSpec((Hd, 1), resident),           # b2a
                pl.BlockSpec((A, Hd), resident),           # w1b
                pl.BlockSpec((A, 1), resident),            # b1b
                pl.BlockSpec((Hd, A), resident),           # w2 (a1 part)
                pl.BlockSpec((A, Hd), resident),           # w2b
                pl.BlockSpec((A, 1), resident),            # b2b
            ],
            out_specs=pl.BlockSpec((2 * A, bm), lambda i: (0, i)),
        ),
        compiler_params=pltpu.CompilerParams(
            dimension_semantics=("parallel",)),
        cost_estimate=pl.CostEstimate(flops=flops,
                                      transcendentals=transcendentals,
                                      bytes_accessed=bytes_accessed),
    )(xt, w12, b1a, b2a, w1b, b1b, w2a1, w2b, b2b)

    return out_t.T                                          # (B, 2A)


def reference_forward(x, params):
    """Pure-JAX mirror of the PyTorch RMMPolicyNet.forward."""
    hi = jax.lax.Precision.HIGHEST
    h1 = jax.nn.relu(jnp.dot(x, params["w1a"].T, precision=hi) + params["b1a"])
    a1 = jax.nn.sigmoid(jnp.dot(h1, params["w1b"].T, precision=hi) + params["b1b"])
    xc = jnp.concatenate([x, a1], axis=1)
    h2 = jax.nn.relu(jnp.dot(xc, params["w2a"].T, precision=hi) + params["b2a"])
    a2 = jnp.tanh(jnp.dot(h2, params["w2b"].T, precision=hi) + params["b2b"])
    return jnp.concatenate([a1, a2], axis=1)


if __name__ == "__main__":
    key = jax.random.PRNGKey(0)
    ks = jax.random.split(key, 9)

    B, state_dim, hidden_dim, action_dim = 64, 16, 32, 8

    x = jax.random.normal(ks[0], (B, state_dim), jnp.float32)
    params = {
        "w1a": jax.random.normal(ks[1], (hidden_dim, state_dim), jnp.float32) * 0.2,
        "b1a": jax.random.normal(ks[2], (hidden_dim,), jnp.float32) * 0.1,
        "w1b": jax.random.normal(ks[3], (action_dim, hidden_dim), jnp.float32) * 0.2,
        "b1b": jax.random.normal(ks[4], (action_dim,), jnp.float32) * 0.1,
        "w2a": jax.random.normal(ks[5], (hidden_dim, state_dim + action_dim),
                                 jnp.float32) * 0.2,
        "b2a": jax.random.normal(ks[6], (hidden_dim,), jnp.float32) * 0.1,
        "w2b": jax.random.normal(ks[7], (action_dim, hidden_dim), jnp.float32) * 0.2,
        "b2b": jax.random.normal(ks[8], (action_dim,), jnp.float32) * 0.1,
    }

    out = rmm_policy_forward(x, params)
    out = jax.block_until_ready(out)

    ref = jax.block_until_ready(reference_forward(x, params))
    assert out.shape == (B, 2 * action_dim), out.shape
    # 2e-3 tolerance: approx-reciprocal sigmoid + default-precision MXU matmuls.
    assert jnp.allclose(out, ref, atol=2e-3, rtol=2e-3), \
        f"max abs err {jnp.max(jnp.abs(out - ref))}"

    print("KERNEL_OK")
</pallas_src>

<mosaic_0001>
module attributes {stable_mosaic.version = 11 : i64} {
  func.func @rmm_policy_kernel(%arg0: i32, %arg1: memref<16x64xf32, #tpu.memory_space<vmem>>, %arg2: memref<64x16xf32, #tpu.memory_space<vmem>>, %arg3: memref<32x1xf32, #tpu.memory_space<vmem>>, %arg4: memref<32x1xf32, #tpu.memory_space<vmem>>, %arg5: memref<8x32xf32, #tpu.memory_space<vmem>>, %arg6: memref<8x1xf32, #tpu.memory_space<vmem>>, %arg7: memref<32x8xf32, #tpu.memory_space<vmem>>, %arg8: memref<8x32xf32, #tpu.memory_space<vmem>>, %arg9: memref<8x1xf32, #tpu.memory_space<vmem>>, %arg10: memref<16x64xf32, #tpu.memory_space<vmem>>) attributes {dimension_semantics = [#tpu.dimension_semantics<parallel>], iteration_bounds = array<i64: 1>, scalar_prefetch = 0 : i64, scratch_operands = 0 : i64, tpu.core_type = #tpu.core_type<tc>, window_params = [{transform_indices = @transform_0, window_bounds = array<i64: 16, 64>}, {pipeline_mode = #tpu.pipeline_mode<synchronous>, transform_indices = @transform_1, window_bounds = array<i64: 64, 16>}, {pipeline_mode = #tpu.pipeline_mode<synchronous>, transform_indices = @transform_2, window_bounds = array<i64: 32, 1>}, {pipeline_mode = #tpu.pipeline_mode<synchronous>, transform_indices = @transform_3, window_bounds = array<i64: 32, 1>}, {pipeline_mode = #tpu.pipeline_mode<synchronous>, transform_indices = @transform_4, window_bounds = array<i64: 8, 32>}, {pipeline_mode = #tpu.pipeline_mode<synchronous>, transform_indices = @transform_5, window_bounds = array<i64: 8, 1>}, {pipeline_mode = #tpu.pipeline_mode<synchronous>, transform_indices = @transform_6, window_bounds = array<i64: 32, 8>}, {pipeline_mode = #tpu.pipeline_mode<synchronous>, transform_indices = @transform_7, window_bounds = array<i64: 8, 32>}, {pipeline_mode = #tpu.pipeline_mode<synchronous>, transform_indices = @transform_8, window_bounds = array<i64: 8, 1>}, {transform_indices = @transform_9, window_bounds = array<i64: 16, 64>}]} {
    %c0 = arith.constant 0 : index
    %c0_0 = arith.constant 0 : index
    %0 = vector.load %arg1[%c0, %c0_0] : memref<16x64xf32, #tpu.memory_space<vmem>>, vector<16x64xf32>
    %c0_1 = arith.constant 0 : index
    %c0_2 = arith.constant 0 : index
    %1 = vector.load %arg2[%c0_1, %c0_2] : memref<64x16xf32, #tpu.memory_space<vmem>>, vector<64x16xf32>
    %cst = arith.constant dense<0.000000e+00> : vector<64x64xf32>
    %2 = tpu.matmul %1, %0, %cst {dimension_numbers = #tpu.dot_dimension_numbers<[1], [0], [0], [1], [0, 0, 1, 1], [], []>} : vector<64x16xf32>, vector<16x64xf32>, vector<64x64xf32> -> vector<64x64xf32>
    %3 = vector.extract_strided_slice %2 {offsets = [0, 0], sizes = [32, 64], strides = [1, 1]} : vector<64x64xf32> to vector<32x64xf32>
    %c0_3 = arith.constant 0 : index
    %c0_4 = arith.constant 0 : index
    %4 = vector.load %arg3[%c0_3, %c0_4] : memref<32x1xf32, #tpu.memory_space<vmem>>, vector<32x1xf32>
    %5 = vector.broadcast %4 : vector<32x1xf32> to vector<32x64xf32>
    %6 = arith.addf %3, %5 : vector<32x64xf32>
    %cst_5 = arith.constant 0.000000e+00 : f32
    %7 = vector.broadcast %cst_5 : f32 to vector<32x64xf32>
    %8 = arith.maximumf %6, %7 : vector<32x64xf32>
    %c0_6 = arith.constant 0 : index
    %c0_7 = arith.constant 0 : index
    %9 = vector.load %arg5[%c0_6, %c0_7] : memref<8x32xf32, #tpu.memory_space<vmem>>, vector<8x32xf32>
    %cst_8 = arith.constant dense<0.000000e+00> : vector<8x64xf32>
    %10 = tpu.matmul %9, %8, %cst_8 {dimension_numbers = #tpu.dot_dimension_numbers<[1], [0], [0], [1], [0, 0, 1, 1], [], []>} : vector<8x32xf32>, vector<32x64xf32>, vector<8x64xf32> -> vector<8x64xf32>
    %c0_9 = arith.constant 0 : index
    %c0_10 = arith.constant 0 : index
    %11 = vector.load %arg6[%c0_9, %c0_10] : memref<8x1xf32, #tpu.memory_space<vmem>>, vector<8x1xf32>
    %12 = vector.broadcast %11 : vector<8x1xf32> to vector<8x64xf32>
    %13 = arith.addf %10, %12 : vector<8x64xf32>
    %cst_11 = arith.constant 0.000000e+00 : f32
    %14 = vector.broadcast %cst_11 : f32 to vector<8x64xf32>
    %15 = arith.subf %14, %13 : vector<8x64xf32>
    %16 = math.exp %15 : vector<8x64xf32>
    %cst_12 = arith.constant 1.000000e+00 : f32
    %17 = vector.broadcast %cst_12 : f32 to vector<8x64xf32>
    %18 = arith.addf %17, %16 : vector<8x64xf32>
    %19 = tpu.reciprocal %18 {approx = true} : vector<8x64xf32> -> vector<8x64xf32>
    %20 = vector.extract_strided_slice %2 {offsets = [32, 0], sizes = [32, 64], strides = [1, 1]} : vector<64x64xf32> to vector<32x64xf32>
    %c0_13 = arith.constant 0 : index
    %c0_14 = arith.constant 0 : index
    %21 = vector.load %arg7[%c0_13, %c0_14] : memref<32x8xf32, #tpu.memory_space<vmem>>, vector<32x8xf32>
    %cst_15 = arith.constant dense<0.000000e+00> : vector<32x64xf32>
    %22 = tpu.matmul %21, %19, %cst_15 {dimension_numbers = #tpu.dot_dimension_numbers<[1], [0], [0], [1], [0, 0, 1, 1], [], []>} : vector<32x8xf32>, vector<8x64xf32>, vector<32x64xf32> -> vector<32x64xf32>
    %23 = arith.addf %20, %22 : vector<32x64xf32>
    %c0_16 = arith.constant 0 : index
    %c0_17 = arith.constant 0 : index
    %24 = vector.load %arg4[%c0_16, %c0_17] : memref<32x1xf32, #tpu.memory_space<vmem>>, vector<32x1xf32>
    %25 = vector.broadcast %24 : vector<32x1xf32> to vector<32x64xf32>
    %26 = arith.addf %23, %25 : vector<32x64xf32>
    %cst_18 = arith.constant 0.000000e+00 : f32
    %27 = vector.broadcast %cst_18 : f32 to vector<32x64xf32>
    %28 = arith.maximumf %26, %27 : vector<32x64xf32>
    %c0_19 = arith.constant 0 : index
    %c0_20 = arith.constant 0 : index
    %29 = vector.load %arg8[%c0_19, %c0_20] : memref<8x32xf32, #tpu.memory_space<vmem>>, vector<8x32xf32>
    %cst_21 = arith.constant dense<0.000000e+00> : vector<8x64xf32>
    %30 = tpu.matmul %29, %28, %cst_21 {dimension_numbers = #tpu.dot_dimension_numbers<[1], [0], [0], [1], [0, 0, 1, 1], [], []>} : vector<8x32xf32>, vector<32x64xf32>, vector<8x64xf32> -> vector<8x64xf32>
    %c0_22 = arith.constant 0 : index
    %c0_23 = arith.constant 0 : index
    %31 = vector.load %arg9[%c0_22, %c0_23] : memref<8x1xf32, #tpu.memory_space<vmem>>, vector<8x1xf32>
    %32 = vector.broadcast %31 : vector<8x1xf32> to vector<8x64xf32>
    %33 = arith.addf %30, %32 : vector<8x64xf32>
    %34 = math.tanh %33 : vector<8x64xf32>
    %35 = tpu.concatenate %19, %34 in 0 : vector<8x64xf32>, vector<8x64xf32> -> vector<16x64xf32>
    %c0_24 = arith.constant 0 : index
    %c0_25 = arith.constant 0 : index
    %36 = vector.load %arg10[%c0_24, %c0_25] : memref<16x64xf32, #tpu.memory_space<vmem>>, vector<16x64xf32>
    tpu.vector_store %arg10[%c0_24, %c0_25], %35 {strides = array<i32>} : memref<16x64xf32, #tpu.memory_space<vmem>>, vector<16x64xf32>,
    return
  }
  func.func @transform_0(%arg0: i32) -> (i32, i32) {
    %c0_i32 = arith.constant 0 : i32
    %c0_i32_0 = arith.constant 0 : i32
    return %c0_i32, %arg0 : i32, i32
  }
  func.func @transform_1(%arg0: i32) -> (i32, i32) {
    %c0_i32 = arith.constant 0 : i32
    %c0_i32_0 = arith.constant 0 : i32
    %c0_i32_1 = arith.constant 0 : i32
    return %c0_i32, %c0_i32_0 : i32, i32
  }
  func.func @transform_2(%arg0: i32) -> (i32, i32) {
    %c0_i32 = arith.constant 0 : i32
    %c0_i32_0 = arith.constant 0 : i32
    %c0_i32_1 = arith.constant 0 : i32
    return %c0_i32, %c0_i32_0 : i32, i32
  }
  func.func @transform_3(%arg0: i32) -> (i32, i32) {
    %c0_i32 = arith.constant 0 : i32
    %c0_i32_0 = arith.constant 0 : i32
    %c0_i32_1 = arith.constant 0 : i32
    return %c0_i32, %c0_i32_0 : i32, i32
  }
  func.func @transform_4(%arg0: i32) -> (i32, i32) {
    %c0_i32 = arith.constant 0 : i32
    %c0_i32_0 = arith.constant 0 : i32
    %c0_i32_1 = arith.constant 0 : i32
    return %c0_i32, %c0_i32_0 : i32, i32
  }
  func.func @transform_5(%arg0: i32) -> (i32, i32) {
    %c0_i32 = arith.constant 0 : i32
    %c0_i32_0 = arith.constant 0 : i32
    %c0_i32_1 = arith.constant 0 : i32
    return %c0_i32, %c0_i32_0 : i32, i32
  }
  func.func @transform_6(%arg0: i32) -> (i32, i32) {
    %c0_i32 = arith.constant 0 : i32
    %c0_i32_0 = arith.constant 0 : i32
    %c0_i32_1 = arith.constant 0 : i32
    return %c0_i32, %c0_i32_0 : i32, i32
  }
  func.func @transform_7(%arg0: i32) -> (i32, i32) {
    %c0_i32 = arith.constant 0 : i32
    %c0_i32_0 = arith.constant 0 : i32
    %c0_i32_1 = arith.constant 0 : i32
    return %c0_i32, %c0_i32_0 : i32, i32
  }
  func.func @transform_8(%arg0: i32) -> (i32, i32) {
    %c0_i32 = arith.constant 0 : i32
    %c0_i32_0 = arith.constant 0 : i32
    %c0_i32_1 = arith.constant 0 : i32
    return %c0_i32, %c0_i32_0 : i32, i32
  }
  func.func @transform_9(%arg0: i32) -> (i32, i32) {
    %c0_i32 = arith.constant 0 : i32
    %c0_i32_0 = arith.constant 0 : i32
    return %c0_i32, %arg0 : i32, i32
  }
}

</mosaic_0001>

<llo_original>
// kernel: tpu_custom_call.1
$region0: #{tpu_custom_call.1}
  #allocation0 [shape = 'u32[]', space=smem, size = 0x4, offset = 0x4, fixed_abs, tag = 'smem constant byte address 0x4 - core index']
  #allocation1 [shape = 'u32[72,128]{1,0:T(1,128)}', space=vmem, size = 0x9000, scoped, tag = 'internal scratch']
  %s0 = inlined_call_operand.vmem [shape: f32[16,64], index: 0, kind: input, shape index: {}]
  %s1 = inlined_call_operand.vmem [shape: f32[64,16], index: 1, kind: input, shape index: {}]
  %s2 = inlined_call_operand.vmem [shape: f32[32,1], index: 2, kind: input, shape index: {}]
  %s3 = inlined_call_operand.vmem [shape: f32[32,1], index: 3, kind: input, shape index: {}]
  %s4 = inlined_call_operand.vmem [shape: f32[8,32], index: 4, kind: input, shape index: {}]
  %s5 = inlined_call_operand.vmem [shape: f32[8,1], index: 5, kind: input, shape index: {}]
  %s6 = inlined_call_operand.vmem [shape: f32[32,8], index: 6, kind: input, shape index: {}]
  %s7 = inlined_call_operand.vmem [shape: f32[8,32], index: 7, kind: input, shape index: {}]
  %s8 = inlined_call_operand.vmem [shape: f32[8,1], index: 8, kind: input, shape index: {}]
  %s9 = inlined_call_operand.hbm [shape: f32[16,64], index: 9, kind: output, shape index: {}]
  %s10 = sld [smem:[#allocation0]]
  $region46: #{tpu_custom_call.1} parent=0
    _
  %s12 = ssub.s32 1, %s10
  %s13 = scalar_select 0, %s12, %s10
  $region1: #{tpu_custom_call.1} parent=0
    #allocation2 [shape = 'u8[8192]{0}', space=vmem, size = 0x2000, scoped, tag = 'output window, operand 0, single buffered']
    #allocation3 [shape = 's32[1]{0}', space=sflag, size = 0x4, scoped, tag = 'scoped memory for tpu_custom_call.1']
    %14 = vsyncpa [#allocation3], 0
    // Predicated region
    $region2: #{tpu_custom_call.1} parent=1 // pred_check
      _
    $region3: #{tpu_custom_call.1} parent=1 // pred_check_branch
      %16 = sbr.rel (0) target = $region5
    $region4: #{tpu_custom_call.1} parent=1 // pred_region
      _
    $region5: #{tpu_custom_call.1} parent=1 // pred_fallthru
      _
    // Predicated region
    $region6: #{tpu_custom_call.1} parent=1 // pred_check
      _
    $region7: #{tpu_custom_call.1} parent=1 // pred_check_branch
      %18 = sbr.rel (0) target = $region9
    $region8: #{tpu_custom_call.1} parent=1 // pred_region
      _
    $region9: #{tpu_custom_call.1} parent=1 // pred_fallthru
      _
    // Predicated region
    $region10: #{tpu_custom_call.1} parent=1 // pred_check
      _
    $region11: #{tpu_custom_call.1} parent=1 // pred_check_branch
      %20 = sbr.rel (0) target = $region13
    $region12: #{tpu_custom_call.1} parent=1 // pred_region
      _
    $region13: #{tpu_custom_call.1} parent=1 // pred_fallthru
      _
    // Predicated region
    $region14: #{tpu_custom_call.1} parent=1 // pred_check
      _
    $region15: #{tpu_custom_call.1} parent=1 // pred_check_branch
      %22 = sbr.rel (0) target = $region17
    $region16: #{tpu_custom_call.1} parent=1 // pred_region
      _
    $region17: #{tpu_custom_call.1} parent=1 // pred_fallthru
      _
    // Predicated region
    $region18: #{tpu_custom_call.1} parent=1 // pred_check
      _
    $region19: #{tpu_custom_call.1} parent=1 // pred_check_branch
      %24 = sbr.rel (0) target = $region21
    $region20: #{tpu_custom_call.1} parent=1 // pred_region
      _
    $region21: #{tpu_custom_call.1} parent=1 // pred_fallthru
      _
    // Predicated region
    $region22: #{tpu_custom_call.1} parent=1 // pred_check
      _
    $region23: #{tpu_custom_call.1} parent=1 // pred_check_branch
      %26 = sbr.rel (0) target = $region25
    $region24: #{tpu_custom_call.1} parent=1 // pred_region
      _
    $region25: #{tpu_custom_call.1} parent=1 // pred_fallthru
      _
    // Predicated region
    $region26: #{tpu_custom_call.1} parent=1 // pred_check
      _
    $region27: #{tpu_custom_call.1} parent=1 // pred_check_branch
      %28 = sbr.rel (0) target = $region29
    $region28: #{tpu_custom_call.1} parent=1 // pred_region
      _
    $region29: #{tpu_custom_call.1} parent=1 // pred_fallthru
      _
    // Predicated region
    $region30: #{tpu_custom_call.1} parent=1 // pred_check
      _
    $region31: #{tpu_custom_call.1} parent=1 // pred_check_branch
      %30 = sbr.rel (0) target = $region33
    $region32: #{tpu_custom_call.1} parent=1 // pred_region
      _
    $region33: #{tpu_custom_call.1} parent=1 // pred_fallthru
      _
    // Predicated region
    $region34: #{tpu_custom_call.1} parent=1 // pred_check
      _
    $region35: #{tpu_custom_call.1} parent=1 // pred_check_branch
      %32 = sbr.rel (0) target = $region37
    $region36: #{tpu_custom_call.1} parent=1 // pred_region
      _
    $region37: #{tpu_custom_call.1} parent=1 // pred_fallthru
      _
    %v33 = vld [vmem:[%s0] sm:$0xff]
    %v34 = vld [vmem:[%s0 + $0x8] sm:$0xff]
    %v35 = vld [vmem:[%s1] sm:$0xff]
    %v36 = vld [vmem:[%s1 + $0x8] sm:$0xff]
    %v37 = vld [vmem:[%s1 + $0x10] sm:$0xff]
    %v38 = vld [vmem:[%s1 + $0x18] sm:$0xff]
    %v39 = vld [vmem:[%s1 + $0x20] sm:$0xff]
    %v40 = vld [vmem:[%s1 + $0x28] sm:$0xff]
    %v41 = vld [vmem:[%s1 + $0x30] sm:$0xff]
    %v42 = vld [vmem:[%s1 + $0x38] sm:$0xff]
    %vm43 = vcmask 130048
    %v45 = vsel %vm43, %v35, 0
    %v48 = vsel %vm43, %v36, 0
    %v51 = vsel %vm43, %v37, 0
    %v54 = vsel %vm43, %v38, 0
    %v57 = vsel %vm43, %v39, 0
    %v60 = vsel %vm43, %v40, 0
    %v63 = vsel %vm43, %v41, 0
    %v66 = vsel %vm43, %v42, 0
    %68 = vmatpush.msra.mxu0 0.0
    %69 = vmatpush.msra.mxu0 0.0
    %70 = vmatpush.msra.mxu0 0.0
    %71 = vmatpush.msra.mxu0 0.0
    %72 = vmatpush.msra.mxu0 0.0
    %73 = vmatpush.msra.mxu0 0.0
    %74 = vmatpush.msra.mxu0 0.0
    %75 = vmatpush.msra.mxu0 0.0
    %76 = vmatpush.msra.mxu0 0.0
    %77 = vmatpush.msra.mxu0 0.0
    %78 = vmatpush.msra.mxu0 0.0
    %79 = vmatpush.msra.mxu0 0.0
    %80 = vmatpush.msra.mxu0 0.0
    %81 = vmatpush.msra.mxu0 0.0
    %82 = vmatpush.msra.mxu0 %v34
    %83 = vmatpush.msra.mxu0 %v33
    %84 = vmatmul.f32.gmra.mxu0 %v45
    %v85 = vpop.f32.mrf.mxu0
    %v86 = vadd.f32 0.0, %v85
    %87 = vmatmul.f32.gmra.mxu0 %v48
    %v88 = vpop.f32.mrf.mxu0
    %v89 = vadd.f32 0.0, %v88
    %90 = vmatmul.f32.gmra.mxu0 %v51
    %v91 = vpop.f32.mrf.mxu0
    %v92 = vadd.f32 0.0, %v91
    %93 = vmatmul.f32.gmra.mxu0 %v54
    %v94 = vpop.f32.mrf.mxu0
    %v95 = vadd.f32 0.0, %v94
    %96 = vmatmul.f32.gmra.mxu0 %v57
    %v97 = vpop.f32.mrf.mxu0
    %v98 = vadd.f32 0.0, %v97
    %99 = vmatmul.f32.gmra.mxu0 %v60
    %v100 = vpop.f32.mrf.mxu0
    %v101 = vadd.f32 0.0, %v100
    %102 = vmatmul.f32.gmra.mxu0 %v63
    %v103 = vpop.f32.mrf.mxu0
    %v104 = vadd.f32 0.0, %v103
    %105 = vmatmul.f32.gmra.mxu0 %v66
    %v106 = vpop.f32.mrf.mxu0
    %v107 = vadd.f32 0.0, %v106
    %108 = vdwg.mxu0
    %v109 = vld [vmem:[%s2] sm:$0xff]
    %v110 = vld [vmem:[%s2 + $0x8] sm:$0xff]
    %v111 = vld [vmem:[%s2 + $0x10] sm:$0xff]
    %v112 = vld [vmem:[%s2 + $0x18] sm:$0xff]
    %114 = vset.pattern.permute.xlu0 0
    %115 = vperm.xlu0 %114, %v109
    %v116 = vpop.permute.xlu0 %115
    %119 = vset.pattern.permute.xlu0 0
    %120 = vperm.xlu0 %119, %v110
    %v121 = vpop.permute.xlu0 %120
    %124 = vset.pattern.permute.xlu0 0
    %125 = vperm.xlu0 %124, %v111
    %v126 = vpop.permute.xlu0 %125
    %129 = vset.pattern.permute.xlu0 0
    %130 = vperm.xlu0 %129, %v112
    %v131 = vpop.permute.xlu0 %130
    %v133 = vadd.f32 %v86, %v116
    %v134 = vadd.f32 %v89, %v121
    %v135 = vadd.f32 %v92, %v126
    %v136 = vadd.f32 %v95, %v131
    %v137 = vmax.f32 %v133, 0.0
    %v138 = vmax.f32 %v134, 0.0
    %v139 = vmax.f32 %v135, 0.0
    %v140 = vmax.f32 %v136, 0.0
    %v141 = vld [vmem:[%s4] sm:$0xff]
    %v142 = vld [vmem:[%s5] sm:$0xff]
    %144 = vset.pattern.permute.xlu0 0
    %145 = vperm.xlu0 %144, %v142
    %v146 = vpop.permute.xlu0 %145
    %vm148 = vcmask 261120
    %v150 = vsel %vm148, %v141, 0
    %152 = vmatpush.msra.mxu0 0.0
    %153 = vmatpush.msra.mxu0 0.0
    %154 = vmatpush.msra.mxu0 0.0
    %155 = vmatpush.msra.mxu0 0.0
    %156 = vmatpush.msra.mxu0 0.0
    %157 = vmatpush.msra.mxu0 0.0
    %158 = vmatpush.msra.mxu0 0.0
    %159 = vmatpush.msra.mxu0 0.0
    %160 = vmatpush.msra.mxu0 0.0
    %161 = vmatpush.msra.mxu0 0.0
    %162 = vmatpush.msra.mxu0 0.0
    %163 = vmatpush.msra.mxu0 0.0
    %164 = vmatpush.msra.mxu0 %v140
    %165 = vmatpush.msra.mxu0 %v139
    %166 = vmatpush.msra.mxu0 %v138
    %167 = vmatpush.msra.mxu0 %v137
    %168 = vmatmul.f32.gmra.mxu0 %v150
    %v169 = vpop.f32.mrf.mxu0
    %v170 = vadd.f32 %v146, %v169
    %171 = vdwg.mxu0
    %v172 = vsub.f32 0.0, %v170
    %v173 = vmul.f32 %v172, 1.442695
    %v174 = vpow.pop %v173
    %v175 = vadd.f32 %v174, 1.0
    %v176 = vrcp.pop %v175
    %v177 = vld [vmem:[%s6] sm:$0xff]
    %v178 = vld [vmem:[%s6 + $0x8] sm:$0xff]
    %v179 = vld [vmem:[%s6 + $0x10] sm:$0xff]
    %v180 = vld [vmem:[%s6 + $0x18] sm:$0xff]
    %vm181 = vcmask 64512
    %v183 = vsel %vm181, %v177, 0
    %v186 = vsel %vm181, %v178, 0
    %v189 = vsel %vm181, %v179, 0
    %v192 = vsel %vm181, %v180, 0
    %194 = vmatpush.msra.mxu0 0.0
    %195 = vmatpush.msra.mxu0 0.0
    %196 = vmatpush.msra.mxu0 0.0
    %197 = vmatpush.msra.mxu0 0.0
    %198 = vmatpush.msra.mxu0 0.0
    %199 = vmatpush.msra.mxu0 0.0
    %200 = vmatpush.msra.mxu0 0.0
    %201 = vmatpush.msra.mxu0 0.0
    %202 = vmatpush.msra.mxu0 0.0
    %203 = vmatpush.msra.mxu0 0.0
    %204 = vmatpush.msra.mxu0 0.0
    %205 = vmatpush.msra.mxu0 0.0
    %206 = vmatpush.msra.mxu0 0.0
    %207 = vmatpush.msra.mxu0 0.0
    %208 = vmatpush.msra.mxu0 0.0
    %209 = vmatpush.msra.mxu0 %v176
    %210 = vmatmul.f32.gmra.mxu0 %v183
    %v211 = vpop.f32.mrf.mxu0
    %v212 = vadd.f32 0.0, %v211
    %213 = vmatmul.f32.gmra.mxu0 %v186
    %v214 = vpop.f32.mrf.mxu0
    %v215 = vadd.f32 0.0, %v214
    %216 = vmatmul.f32.gmra.mxu0 %v189
    %v217 = vpop.f32.mrf.mxu0
    %v218 = vadd.f32 0.0, %v217
    %219 = vmatmul.f32.gmra.mxu0 %v192
    %v220 = vpop.f32.mrf.mxu0
    %v221 = vadd.f32 0.0, %v220
    %222 = vdwg.mxu0
    %v223 = vadd.f32 %v98, %v212
    %v224 = vadd.f32 %v101, %v215
    %v225 = vadd.f32 %v104, %v218
    %v226 = vadd.f32 %v107, %v221
    %v227 = vld [vmem:[%s3] sm:$0xff]
    %v228 = vld [vmem:[%s3 + $0x8] sm:$0xff]
    %v229 = vld [vmem:[%s3 + $0x10] sm:$0xff]
    %v230 = vld [vmem:[%s3 + $0x18] sm:$0xff]
    %232 = vset.pattern.permute.xlu0 0
    %233 = vperm.xlu0 %232, %v227
    %v234 = vpop.permute.xlu0 %233
    %237 = vset.pattern.permute.xlu0 0
    %238 = vperm.xlu0 %237, %v228
    %v239 = vpop.permute.xlu0 %238
    %242 = vset.pattern.permute.xlu0 0
    %243 = vperm.xlu0 %242, %v229
    %v244 = vpop.permute.xlu0 %243
    %247 = vset.pattern.permute.xlu0 0
    %248 = vperm.xlu0 %247, %v230
    %v249 = vpop.permute.xlu0 %248
    %v251 = vadd.f32 %v223, %v234
    %v252 = vadd.f32 %v224, %v239
    %v253 = vadd.f32 %v225, %v244
    %v254 = vadd.f32 %v226, %v249
    %v255 = vmax.f32 %v251, 0.0
    %v256 = vmax.f32 %v252, 0.0
    %v257 = vmax.f32 %v253, 0.0
    %v258 = vmax.f32 %v254, 0.0
    %v259 = vld [vmem:[%s7] sm:$0xff]
    %v260 = vld [vmem:[%s8] sm:$0xff]
    %262 = vset.pattern.permute.xlu0 0
    %263 = vperm.xlu0 %262, %v260
    %v264 = vpop.permute.xlu0 %263
    %v267 = vsel %vm148, %v259, 0
    %269 = vmatpush.msra.mxu0 0.0
    %270 = vmatpush.msra.mxu0 0.0
    %271 = vmatpush.msra.mxu0 0.0
    %272 = vmatpush.msra.mxu0 0.0
    %273 = vmatpush.msra.mxu0 0.0
    %274 = vmatpush.msra.mxu0 0.0
    %275 = vmatpush.msra.mxu0 0.0
    %276 = vmatpush.msra.mxu0 0.0
    %277 = vmatpush.msra.mxu0 0.0
    %278 = vmatpush.msra.mxu0 0.0
    %279 = vmatpush.msra.mxu0 0.0
    %280 = vmatpush.msra.mxu0 0.0
    %281 = vmatpush.msra.mxu0 %v258
    %282 = vmatpush.msra.mxu0 %v257
    %283 = vmatpush.msra.mxu0 %v256
    %284 = vmatpush.msra.mxu0 %v255
    %285 = vmatmul.f32.gmra.mxu0 %v267
    %v286 = vpop.f32.mrf.mxu0
    %v287 = vadd.f32 %v264, %v286
    %288 = vdwg.mxu0
    %v289 = vtanh.pop %v287
    %vm290 = vcmask 523264
    %291 = vst.msk [vmem:[#allocation2] sm:$0xff] %vm290, %v176
    %292 = vst.msk [vmem:[#allocation2 + $0x8] sm:$0xff] %vm290, %v289
    // Predicated region
    $region38: #{tpu_custom_call.1} parent=1 // pred_check
      _
    $region39: #{tpu_custom_call.1} parent=1 // pred_check_branch
      %294 = sbr.rel (0) target = $region41
    $region40: #{tpu_custom_call.1} parent=1 // pred_region
      %296 = vsyncadd [#allocation3], 0
      %s297 = sshll.u32 [#allocation2], 4
      %s298 = int_to_ptr.vmem [resolvable:$true] %s297
      %s299 = sshll.u32 %s9, 4
      %s300 = int_to_ptr.hbm [resolvable:$true] %s299
      %305 = dma.vmem_to_hbm [thread:$0]  %s298, 256, %s300, [#allocation3], 128, 128, 8
    $region41: #{tpu_custom_call.1} parent=1 // pred_fallthru
      _
    // Predicated region
    $region42: #{tpu_custom_call.1} parent=1 // pred_check
      _
    $region43: #{tpu_custom_call.1} parent=1 // pred_check_branch
      %307 = sbr.rel (0) target = $region45
    $region44: #{tpu_custom_call.1} parent=1 // pred_region
      %309 = dma.done [#allocation3], 256
    $region45: #{tpu_custom_call.1} parent=1 // pred_fallthru
      _
    %310 = vsyncpa [#allocation3], 1

</llo_original>
